<compile_context>
chip_gen: v5e
topology: v5e:2x2
jax: 0.10.0
libtpu: 0.0.40
codegen_flags: <defaults>
</compile_context>

<pallas_src>
import jax
import jax.numpy as jnp
from jax.experimental import pallas as pl
from jax.experimental.pallas import tpu as pltpu


_BT = 8                              # preferred batch rows per grid step
_X_TILE_BUDGET = 4 * 1024 * 1024     # target bytes per x input buffer
_SEQ_TILE_CAP = 2048                 # max sequence rows per tile


def _round_up(n, m):
    return ((n + m - 1) // m) * m


def _choose_h_tile(H):
    # Tile H only when it is large and a lane-aligned tile divides it evenly;
    # a full-extent block is always legal under the (8,128) rule.
    if H <= 1024 or H % 128 != 0:
        return H
    for ht in (1024, 512, 256, 128):
        if H % ht == 0:
            return ht
    return H


def _choose_batch_tile(B, Ht, itemsize, budget):
    # Prefer 8 sublane-aligned rows; otherwise take the whole batch as one
    # block (legal: equal to the full dim) so x never has to be pad-copied.
    if B % _BT == 0:
        return _BT, B
    if B * 8 * Ht * itemsize <= budget:
        return B, B
    return _BT, _round_up(B, _BT)     # rare fallback: pad the batch axis


def _choose_seq_tile(S, cap):
    # cap is a multiple of 8.  Full extent if it fits (always legal).
    if S <= cap:
        return S, S
    # Largest multiple-of-8 tile that divides S exactly -> no padding copy.
    min_ok = max(8, cap // 8)         # keep tiles within ~8x of the budget
    st = cap
    while st >= min_ok:
        if S % st == 0:
            return st, S
        st -= 8
    # Pathological S: pad the sequence axis (padded mask rows are zero).
    st = max(8, cap)
    return st, _round_up(S, st)


def _masked_avg_pool_kernel(x_ref, m_ref, o_ref, acc_ref, cnt_ref):
    # x_ref: (Bt, St, Ht)   m_ref: (Bt, St, 1)   o_ref: (Bt, Ht)
    # acc_ref: (Bt, Ht) f32 scratch    cnt_ref: (Bt, 1) f32 scratch
    s_idx = pl.program_id(2)

    @pl.when(s_idx == 0)
    def _init():
        acc_ref[...] = jnp.zeros_like(acc_ref)
        cnt_ref[...] = jnp.zeros_like(cnt_ref)

    x = x_ref[...].astype(jnp.float32)           # (Bt, St, Ht)
    m = m_ref[...].astype(jnp.float32)           # (Bt, St, 1)
    acc_ref[...] += jnp.sum(x * m, axis=1)       # f32 accumulation of sum_x
    cnt_ref[...] += jnp.sum(m, axis=1)           # f32 accumulation of sum_mask

    @pl.when(s_idx == pl.num_programs(2) - 1)
    def _finalize():
        cnt = cnt_ref[...]
        denom = jnp.where(cnt == 0.0, jnp.ones_like(cnt), cnt)
        o_ref[...] = (acc_ref[...] / denom).astype(o_ref.dtype)


def masked_average_pooling(x, mask, *, x_tile_budget=_X_TILE_BUDGET):
    """x: (B, S, H); mask: (B, S) or (B, S, 1). Returns (B, H)."""
    if mask.ndim == 2:
        mask = mask[..., None]                   # (B, S, 1)
    mask = mask.astype(x.dtype)

    B, S, H = x.shape
    itemsize = jnp.dtype(x.dtype).itemsize

    Ht = _choose_h_tile(H)
    Bt, B_pad = _choose_batch_tile(B, Ht, itemsize, x_tile_budget)

    st_cap = max(8, (x_tile_budget // (Bt * Ht * itemsize)) // 8 * 8)
    st_cap = min(st_cap, _SEQ_TILE_CAP)
    St, S_pad = _choose_seq_tile(S, st_cap)

    # Padding only triggers on the rare fallback paths above.  Padded seq rows
    # carry mask == 0 (contribute nothing); padded batch rows are cut off at
    # the end.
    if B_pad != B or S_pad != S:
        x = jnp.pad(x, ((0, B_pad - B), (0, S_pad - S), (0, 0)))
        mask = jnp.pad(mask, ((0, B_pad - B), (0, S_pad - S), (0, 0)))

    grid = (B_pad // Bt, H // Ht, S_pad // St)   # reduction axis (S) last

    out = pl.pallas_call(
        _masked_avg_pool_kernel,
        out_shape=jax.ShapeDtypeStruct((B_pad, H), x.dtype),
        grid_spec=pltpu.PrefetchScalarGridSpec(
            num_scalar_prefetch=0,
            grid=grid,
            in_specs=[
                pl.BlockSpec((Bt, St, Ht), lambda b, h, s: (b, s, h)),
                pl.BlockSpec((Bt, St, 1), lambda b, h, s: (b, s, 0)),
            ],
            out_specs=pl.BlockSpec((Bt, Ht), lambda b, h, s: (b, h)),
            scratch_shapes=[
                pltpu.VMEM((Bt, Ht), jnp.float32),   # sum_x accumulator
                pltpu.VMEM((Bt, 1), jnp.float32),    # mask-count accumulator
            ],
        ),
        compiler_params=pltpu.CompilerParams(
            dimension_semantics=("parallel", "parallel", "arbitrary"),
            vmem_limit_bytes=32 * 1024 * 1024,
        ),
    )(x, mask)

    return out[:B] if B_pad != B else out


def _reference(x, mask):
    if mask.ndim == 2:
        mask = mask[..., None]
    mask = mask.astype(x.dtype)
    sum_x = jnp.sum(x * mask, axis=1)
    sum_m = jnp.sum(mask, axis=1)
    sum_m = jnp.where(sum_m == 0, jnp.ones_like(sum_m), sum_m)
    return sum_x / sum_m


if __name__ == "__main__":
    # 1) Small shape from the module's forward; row 1 has an all-zero mask to
    #    exercise the sum_mask == 0 clamp.  Full-extent blocks, no padding.
    B, S, H = 2, 8, 32
    kx, km = jax.random.split(jax.random.PRNGKey(0))
    x = jax.random.normal(kx, (B, S, H), dtype=jnp.float32)
    mask = (jax.random.uniform(km, (B, S)) > 0.4).astype(jnp.float32)
    mask = mask.at[1].set(0.0)
    out = masked_average_pooling(x, mask)
    jax.block_until_ready(out)
    assert out.shape == (B, H)
    assert jnp.allclose(out, _reference(x, mask), atol=1e-5, rtol=1e-5)

    # 2) Non-multiple-of-8 batch handled via a full-batch block (no padding);
    #    mask already 3-D.
    B2, S2, H2 = 4, 640, 256
    kx2, km2 = jax.random.split(jax.random.PRNGKey(1))
    x2 = jax.random.normal(kx2, (B2, S2, H2), dtype=jnp.float32)
    mask2 = (jax.random.uniform(km2, (B2, S2, 1)) > 0.5).astype(jnp.float32)
    out2 = masked_average_pooling(x2, mask2)
    jax.block_until_ready(out2)
    assert out2.shape == (B2, H2)
    assert jnp.allclose(out2, _reference(x2, mask2), atol=1e-4, rtol=1e-4)

    # 3) Multi-step sequence reduction (pl.when init/finalize across grid
    #    steps) forced with a small tile budget; batch tiled in groups of 8.
    B3, S3, H3 = 16, 256, 128
    kx3, km3 = jax.random.split(jax.random.PRNGKey(2))
    x3 = jax.random.normal(kx3, (B3, S3, H3), dtype=jnp.float32)
    mask3 = (jax.random.uniform(km3, (B3, S3)) > 0.3).astype(jnp.float32)
    out3 = masked_average_pooling(x3, mask3, x_tile_budget=64 * 1024)
    jax.block_until_ready(out3)
    assert out3.shape == (B3, H3)
    assert jnp.allclose(out3, _reference(x3, mask3), atol=1e-4, rtol=1e-4)

    # 4) Pathological sequence length that hits the padding fallback path.
    B4, S4, H4 = 3, 50, 32
    kx4, km4 = jax.random.split(jax.random.PRNGKey(3))
    x4 = jax.random.normal(kx4, (B4, S4, H4), dtype=jnp.float32)
    mask4 = (jax.random.uniform(km4, (B4, S4)) > 0.5).astype(jnp.float32)
    out4 = masked_average_pooling(x4, mask4, x_tile_budget=4 * 1024)
    jax.block_until_ready(out4)
    assert out4.shape == (B4, H4)
    assert jnp.allclose(out4, _reference(x4, mask4), atol=1e-5, rtol=1e-5)

    print("KERNEL_OK")
</pallas_src>

<mosaic_0001>
module attributes {stable_mosaic.version = 11 : i64} {
  func.func @_masked_avg_pool_kernel(%arg0: i32, %arg1: i32, %arg2: i32, %arg3: memref<2x8x32xf32, #tpu.memory_space<vmem>>, %arg4: memref<2x8x1xf32, #tpu.memory_space<vmem>>, %arg5: memref<2x32xf32, #tpu.memory_space<vmem>>, %arg6: memref<2x32xf32, #tpu.memory_space<vmem>>, %arg7: memref<2x1xf32, #tpu.memory_space<vmem>>) attributes {dimension_semantics = [#tpu.dimension_semantics<parallel>, #tpu.dimension_semantics<parallel>, #tpu.dimension_semantics<arbitrary>], iteration_bounds = array<i64: 1, 1, 1>, scalar_prefetch = 0 : i64, scratch_operands = 2 : i64, tpu.core_type = #tpu.core_type<tc>, window_params = [{transform_indices = @transform_0, window_bounds = array<i64: 2, 8, 32>}, {transform_indices = @transform_1, window_bounds = array<i64: 2, 8, 1>}, {transform_indices = @transform_2, window_bounds = array<i64: 2, 32>}]} {
    %c0_i32 = arith.constant 0 : i32
    %0 = arith.cmpi eq, %arg2, %c0_i32 : i32
    %1 = arith.extui %0 : i1 to i32
    %c0_i32_0 = arith.constant 0 : i32
    %2 = arith.cmpi ne, %1, %c0_i32_0 : i32
    scf.if %2 {
      %cst_17 = arith.constant 0.000000e+00 : f32
      %18 = vector.broadcast %cst_17 : f32 to vector<2x32xf32>
      %c0_18 = arith.constant 0 : index
      %c0_19 = arith.constant 0 : index
      %19 = vector.load %arg6[%c0_18, %c0_19] : memref<2x32xf32, #tpu.memory_space<vmem>>, vector<2x32xf32>
      tpu.vector_store %arg6[%c0_18, %c0_19], %18 {strides = array<i32>} : memref<2x32xf32, #tpu.memory_space<vmem>>, vector<2x32xf32>,
      %cst_20 = arith.constant 0.000000e+00 : f32
      %20 = vector.broadcast %cst_20 : f32 to vector<2x1xf32>
      %c0_21 = arith.constant 0 : index
      %c0_22 = arith.constant 0 : index
      %21 = vector.load %arg7[%c0_21, %c0_22] : memref<2x1xf32, #tpu.memory_space<vmem>>, vector<2x1xf32>
      tpu.vector_store %arg7[%c0_21, %c0_22], %20 {strides = array<i32>} : memref<2x1xf32, #tpu.memory_space<vmem>>, vector<2x1xf32>,
    } else {
    }
    %c0 = arith.constant 0 : index
    %c0_1 = arith.constant 0 : index
    %c0_2 = arith.constant 0 : index
    %3 = vector.load %arg3[%c0, %c0_1, %c0_2] : memref<2x8x32xf32, #tpu.memory_space<vmem>>, vector<2x8x32xf32>
    %c0_3 = arith.constant 0 : index
    %c0_4 = arith.constant 0 : index
    %c0_5 = arith.constant 0 : index
    %4 = vector.load %arg4[%c0_3, %c0_4, %c0_5] : memref<2x8x1xf32, #tpu.memory_space<vmem>>, vector<2x8x1xf32>
    %c0_6 = arith.constant 0 : index
    %c0_7 = arith.constant 0 : index
    %5 = vector.load %arg6[%c0_6, %c0_7] : memref<2x32xf32, #tpu.memory_space<vmem>>, vector<2x32xf32>
    %6 = vector.broadcast %4 : vector<2x8x1xf32> to vector<2x8x32xf32>
    %7 = arith.mulf %3, %6 : vector<2x8x32xf32>
    %cst = arith.constant dense<0.000000e+00> : vector<2x32xf32>
    %8 = vector.multi_reduction <add>, %7, %cst [1] : vector<2x8x32xf32> to vector<2x32xf32>
    %9 = arith.addf %5, %8 : vector<2x32xf32>
    %c0_8 = arith.constant 0 : index
    %c0_9 = arith.constant 0 : index
    %10 = vector.load %arg6[%c0_8, %c0_9] : memref<2x32xf32, #tpu.memory_space<vmem>>, vector<2x32xf32>
    tpu.vector_store %arg6[%c0_8, %c0_9], %9 {strides = array<i32>} : memref<2x32xf32, #tpu.memory_space<vmem>>, vector<2x32xf32>,
    %c0_10 = arith.constant 0 : index
    %c0_11 = arith.constant 0 : index
    %11 = vector.load %arg7[%c0_10, %c0_11] : memref<2x1xf32, #tpu.memory_space<vmem>>, vector<2x1xf32>
    %cst_12 = arith.constant dense<0.000000e+00> : vector<2x1xf32>
    %12 = vector.multi_reduction <add>, %4, %cst_12 [1] : vector<2x8x1xf32> to vector<2x1xf32>
    %13 = arith.addf %11, %12 : vector<2x1xf32>
    %c0_13 = arith.constant 0 : index
    %c0_14 = arith.constant 0 : index
    %14 = vector.load %arg7[%c0_13, %c0_14] : memref<2x1xf32, #tpu.memory_space<vmem>>, vector<2x1xf32>
    tpu.vector_store %arg7[%c0_13, %c0_14], %13 {strides = array<i32>} : memref<2x1xf32, #tpu.memory_space<vmem>>, vector<2x1xf32>,
    %c0_i32_15 = arith.constant 0 : i32
    %15 = arith.cmpi eq, %arg2, %c0_i32_15 : i32
    %16 = arith.extui %15 : i1 to i32
    %c0_i32_16 = arith.constant 0 : i32
    %17 = arith.cmpi ne, %16, %c0_i32_16 : i32
    scf.if %17 {
      %c0_17 = arith.constant 0 : index
      %c0_18 = arith.constant 0 : index
      %18 = vector.load %arg7[%c0_17, %c0_18] : memref<2x1xf32, #tpu.memory_space<vmem>>, vector<2x1xf32>
      %cst_19 = arith.constant 0.000000e+00 : f32
      %19 = vector.broadcast %cst_19 : f32 to vector<2x1xf32>
      %20 = arith.cmpf oeq, %18, %19 : vector<2x1xf32>
      %cst_20 = arith.constant 1.000000e+00 : f32
      %21 = vector.broadcast %cst_20 : f32 to vector<2x1xf32>
      %22 = arith.select %20, %21, %18 : vector<2x1xi1>, vector<2x1xf32>
      %c0_21 = arith.constant 0 : index
      %c0_22 = arith.constant 0 : index
      %23 = vector.load %arg6[%c0_21, %c0_22] : memref<2x32xf32, #tpu.memory_space<vmem>>, vector<2x32xf32>
      %24 = vector.broadcast %22 : vector<2x1xf32> to vector<2x32xf32>
      %25 = arith.divf %23, %24 : vector<2x32xf32>
      %c0_23 = arith.constant 0 : index
      %c0_24 = arith.constant 0 : index
      %26 = vector.load %arg5[%c0_23, %c0_24] : memref<2x32xf32, #tpu.memory_space<vmem>>, vector<2x32xf32>
      tpu.vector_store %arg5[%c0_23, %c0_24], %25 {strides = array<i32>} : memref<2x32xf32, #tpu.memory_space<vmem>>, vector<2x32xf32>,
    } else {
    }
    return
  }
  func.func @transform_0(%arg0: i32, %arg1: i32, %arg2: i32) -> (i32, i32, i32) {
    %c0_i32 = arith.constant 0 : i32
    return %arg0, %arg2, %arg1 : i32, i32, i32
  }
  func.func @transform_1(%arg0: i32, %arg1: i32, %arg2: i32) -> (i32, i32, i32) {
    %c0_i32 = arith.constant 0 : i32
    %c0_i32_0 = arith.constant 0 : i32
    return %arg0, %arg2, %c0_i32 : i32, i32, i32
  }
  func.func @transform_2(%arg0: i32, %arg1: i32, %arg2: i32) -> (i32, i32) {
    %c0_i32 = arith.constant 0 : i32
    return %arg0, %arg1 : i32, i32
  }
}

</mosaic_0001>

<llo_original>
// kernel: tpu_custom_call.1
$region0: #{tpu_custom_call.1}
  #allocation0 [shape = 'u32[]', space=smem, size = 0x4, offset = 0x4, fixed_abs, tag = 'smem constant byte address 0x4 - core index']
  #allocation1 [shape = 'u32[72,128]{1,0:T(1,128)}', space=vmem, size = 0x9000, scoped, tag = 'internal scratch']
  #allocation2 [shape = 'f32[2,32]{1,0:T(2,128)}', space=vmem, size = 0x400, scoped, tag = 'scratch operand']
  #allocation3 [shape = 'f32[2,1]{1,0:T(2,128)}', space=vmem, size = 0x400, scoped, tag = 'scratch operand']
  %s0 = inlined_call_operand.vmem [shape: f32[2,8,32], index: 0, kind: input, shape index: {}]
  %s1 = inlined_call_operand.vmem [shape: f32[2,8,1], index: 1, kind: input, shape index: {}]
  %s2 = inlined_call_operand.hbm [shape: f32[2,32], index: 2, kind: output, shape index: {}]
  %s3 = sld [smem:[#allocation0]]
  $region26: #{tpu_custom_call.1} parent=0
    _
  %s5 = ssub.s32 1, %s3
  %s6 = scalar_select 0, %s5, %s3
  $region1: #{tpu_custom_call.1} parent=0
    #allocation4 [shape = 'u8[1024]{0}', space=vmem, size = 0x400, scoped, tag = 'output window, operand 0, single buffered']
    #allocation5 [shape = 's32[1]{0}', space=sflag, size = 0x4, scoped, tag = 'scoped memory for tpu_custom_call.1']
    %7 = vsyncpa [#allocation5], 0
    // Predicated region
    $region2: #{tpu_custom_call.1} parent=1 // pred_check
      _
    $region3: #{tpu_custom_call.1} parent=1 // pred_check_branch
      %9 = sbr.rel (0) target = $region5
    $region4: #{tpu_custom_call.1} parent=1 // pred_region
      _
    $region5: #{tpu_custom_call.1} parent=1 // pred_fallthru
      _
    // Predicated region
    $region6: #{tpu_custom_call.1} parent=1 // pred_check
      _
    $region7: #{tpu_custom_call.1} parent=1 // pred_check_branch
      %11 = sbr.rel (0) target = $region9
    $region8: #{tpu_custom_call.1} parent=1 // pred_region
      _
    $region9: #{tpu_custom_call.1} parent=1 // pred_fallthru
      _
    %p12 = scmp.eq.s32.totalorder 0, 0
    // Predicated region
    $region10: #{tpu_custom_call.1} parent=1 // pred_check
      %p13 = pneg %p12
    $region11: #{tpu_custom_call.1} parent=1 // pred_check_branch
      %15 = sbr.rel (%p13) target = $region13
    $region12: #{tpu_custom_call.1} parent=1 // pred_region
      %vm16 = vcmask 254976
      %17 = vst.msk [vmem:[#allocation2] sm:$0x3] %vm16, 0.0
      %vm18 = vcmask 1024
      %19 = vst.msk [vmem:[#allocation3] sm:$0x3] %vm18, 0.0
    $region13: #{tpu_custom_call.1} parent=1 // pred_fallthru
      _
    %v20 = vld [vmem:[%s0] sm:$0xff]
    %v21 = vld [vmem:[%s0 + $0x8] sm:$0xff]
    %v22 = vld [vmem:[%s1] sm:$0xff]
    %v23 = vld [vmem:[%s1 + $0x8] sm:$0xff]
    %v24 = vld [vmem:[#allocation2] sm:$0x3]
    %26 = vset.pattern.permute.xlu0 0
    %27 = vperm.xlu0 %26, %v22
    %v28 = vpop.permute.xlu0 %27
    %31 = vset.pattern.permute.xlu0 0
    %32 = vperm.xlu0 %31, %v23
    %v33 = vpop.permute.xlu0 %32
    %v35 = vmul.f32 %v20, %v28
    %v36 = vmul.f32 %v21, %v33
    %vm37 = vcmask 261120
    %v38 = vsel %vm37, %v35, 0.0
    %v39 = vrot.slane %v38, 4
    %v40 = vadd.f32 %v38, %v39
    %v41 = vrot.slane %v40, 2
    %v42 = vadd.f32 %v40, %v41
    %v43 = vrot.slane %v42, 1
    %v44 = vadd.f32 %v42, %v43
    %v45 = vsel %vm37, %v36, 0.0
    %v46 = vrot.slane %v45, 4
    %v47 = vadd.f32 %v45, %v46
    %v48 = vrot.slane %v47, 2
    %v49 = vadd.f32 %v47, %v48
    %v50 = vrot.slane %v49, 1
    %v51 = vadd.f32 %v49, %v50
    %vm54 = vcmask 1041409
    %v55 = vsel %vm54, %v51, %v44
    %v57 = vadd.f32 %v24, %v55
    %vm58 = vcmask 254976
    %59 = vst.msk [vmem:[#allocation2] sm:$0x3] %vm58, %v57
    %v60 = vld [vmem:[#allocation3] sm:$0x3]
    %vm61 = vcmask 7168
    %v62 = vsel %vm61, %v22, 0.0
    %v63 = vrot.slane %v62, 4
    %v64 = vadd.f32 %v62, %v63
    %v65 = vrot.slane %v64, 2
    %v66 = vadd.f32 %v64, %v65
    %v67 = vrot.slane %v66, 1
    %v68 = vadd.f32 %v66, %v67
    %v69 = vsel %vm61, %v23, 0.0
    %v70 = vrot.slane %v69, 4
    %v71 = vadd.f32 %v69, %v70
    %v72 = vrot.slane %v71, 2
    %v73 = vadd.f32 %v71, %v72
    %v74 = vrot.slane %v73, 1
    %v75 = vadd.f32 %v73, %v74
    %v78 = vsel %vm54, %v75, %v68
    %v80 = vadd.f32 %v60, %v78
    %vm81 = vcmask 1024
    %82 = vst.msk [vmem:[#allocation3] sm:$0x3] %vm81, %v80
    // Predicated region
    $region14: #{tpu_custom_call.1} parent=1 // pred_check
      %p83 = pneg %p12
    $region15: #{tpu_custom_call.1} parent=1 // pred_check_branch
      %85 = sbr.rel (%p83) target = $region17
    $region16: #{tpu_custom_call.1} parent=1 // pred_region
      %v86 = vld [vmem:[#allocation3] sm:$0x3]
      %vm87 = vcmp.eq.f32.partialorder %v86, 0.0
      %v88 = vsel %vm87, 1.0, %v86
      %v89 = vld [vmem:[#allocation2] sm:$0x3]
      %91 = vset.pattern.permute.xlu0 0
      %92 = vperm.xlu0 %91, %v88
      %v93 = vpop.permute.xlu0 %92
      %v95 = vrcp.pop %v93
      %v96 = vmul.f32 %v93, %v95
      %v97 = vsub.f32 1.0, %v96
      %v98 = vmul.f32 %v95, %v97
      %v99 = vadd.f32 %v95, %v98
      %vm100 = vweird.f32 %v93
      %vm101 = vweird.f32 %v95
      %vm102 = vmor %vm100, %vm101
      %v103 = vsel %vm102, %v95, %v99
      %v104 = vand.u32 2147483647, %v93
      %vm105 = vcmp.eq.f32.partialorder %v104, 8.507059e+37
      %v106 = vand.u32 %v93, 2147483648
      %v107 = vor.u32 1.1754944e-38, %v106
      %v108 = vsel %vm105, %v107, %v103
      %v109 = vmul.f32 %v89, %v108
      %110 = vst.msk [vmem:[#allocation4] sm:$0x3] %vm58, %v109
    $region17: #{tpu_custom_call.1} parent=1 // pred_fallthru
      _
    // Predicated region
    $region18: #{tpu_custom_call.1} parent=1 // pred_check
      _
    $region19: #{tpu_custom_call.1} parent=1 // pred_check_branch
      %112 = sbr.rel (0) target = $region21
    $region20: #{tpu_custom_call.1} parent=1 // pred_region
      %114 = vsyncadd [#allocation5], 0
      %s116 = sshll.u32 [#allocation4], 4
      %s117 = int_to_ptr.vmem [resolvable:$true] %s116
      %s118 = sshll.u32 %s2, 4
      %s119 = int_to_ptr.hbm [resolvable:$true] %s118
      %121 = dma.vmem_to_hbm [thread:$0]  %s117, 32, %s119, [#allocation5]
    $region21: #{tpu_custom_call.1} parent=1 // pred_fallthru
      _
    // Predicated region
    $region22: #{tpu_custom_call.1} parent=1 // pred_check
      _
    $region23: #{tpu_custom_call.1} parent=1 // pred_check_branch
      %123 = sbr.rel (0) target = $region25
    $region24: #{tpu_custom_call.1} parent=1 // pred_region
      %125 = dma.done [#allocation5], 32
    $region25: #{tpu_custom_call.1} parent=1 // pred_fallthru
      _
    %126 = vsyncpa [#allocation5], 1

</llo_original>
